<compile_context>
chip_gen: v6e
topology: v6e:2x2x1
jax: 0.10.0
libtpu: 0.0.40
codegen_flags: <defaults>
</compile_context>

<pallas_src>
import jax
import jax.numpy as jnp
from jax.experimental import pallas as pl
from jax.experimental.pallas import tpu as pltpu

STATE_SPACE = 4     # CartPole-v1 observation_space.shape[0]
ACTION_SPACE = 2    # CartPole-v1 action_space.n
HIDDEN = 128
DROP_P = 0.6
KEEP_P = 1.0 - DROP_P


def policy_kernel(x_ref, w1_ref, dw_ref, mask_ref, o_ref):
    x = x_ref[...]            # (tb, 4)
    w1 = w1_ref[...]          # (4, 128)

    # ---- Linear 1 as 4 unrolled VPU broadcast-FMAs: (tb,4)@(4,128) ----
    h = x[:, 0:1] * w1[0:1, :]
    for j in range(1, STATE_SPACE):
        h = h + x[:, j:j + 1] * w1[j:j + 1, :]

    # ---- Dropout(p=0.6), training-mode semantics (pre-scaled keep mask) ----
    h = h * mask_ref[...]

    # ---- ReLU ----
    h = jnp.maximum(h, 0.0)

    # ---- Head: softmax over 2 logits == sigmoid of the logit difference ----
    # d = h @ (w2[:,0] - w2[:,1]);  p0 = sigmoid(d);  p1 = 1 - p0
    d = jnp.sum(h * dw_ref[...], axis=-1, keepdims=True)     # (tb, 1)
    p0 = 1.0 / (1.0 + jnp.exp(-d))
    o_ref[...] = jnp.concatenate([p0, 1.0 - p0], axis=-1)    # (tb, 2)


def make_dropout_mask(key, batch):
    """Pre-scaled keep mask: Bernoulli(keep_p)/keep_p, as in torch Dropout train mode."""
    keep = jax.random.bernoulli(key, KEEP_P, (batch, HIDDEN))
    return keep.astype(jnp.float32) * (1.0 / KEEP_P)


def policy_forward(x, w1, w2, mask, *, tile_b=512):
    """x: (B,4) f32; w1: (4,128); w2: (128,2); mask: (B,128) pre-scaled keep mask."""
    B = x.shape[0]
    # Head weight difference -> single (1,128) row, reduced on the VPU/XLU in-kernel.
    dw = (w2[:, 0] - w2[:, 1]).reshape(1, HIDDEN).astype(jnp.float32)

    tb = min(tile_b, ((B + 7) // 8) * 8)      # 8-row-aligned batch tile
    n_tiles = -(-B // tb)
    Bp = n_tiles * tb
    if Bp != B:
        pad = Bp - B
        x = jnp.pad(x, ((0, pad), (0, 0)))
        mask = jnp.pad(mask, ((0, pad), (0, 0)))

    out = pl.pallas_call(
        policy_kernel,
        out_shape=jax.ShapeDtypeStruct((Bp, ACTION_SPACE), jnp.float32),
        grid=(n_tiles,),
        in_specs=[
            pl.BlockSpec((tb, STATE_SPACE), lambda i: (i, 0)),       # x tile
            pl.BlockSpec((STATE_SPACE, HIDDEN), lambda i: (0, 0)),   # w1 (whole)
            pl.BlockSpec((1, HIDDEN), lambda i: (0, 0)),             # dw (whole)
            pl.BlockSpec((tb, HIDDEN), lambda i: (i, 0)),            # dropout mask tile
        ],
        out_specs=pl.BlockSpec((tb, ACTION_SPACE), lambda i: (i, 0)),
        compiler_params=pltpu.CompilerParams(
            dimension_semantics=("parallel",)),
    )(x, w1, dw, mask)
    return out[:B]


def init_params(key):
    """nn.Linear default init: U(-1/sqrt(fan_in), 1/sqrt(fan_in)).
    Weights stored as (in, out) so the kernel uses x @ W directly."""
    k1, k2 = jax.random.split(key)
    b1 = 1.0 / jnp.sqrt(jnp.float32(STATE_SPACE))
    b2 = 1.0 / jnp.sqrt(jnp.float32(HIDDEN))
    w1 = jax.random.uniform(k1, (STATE_SPACE, HIDDEN), jnp.float32, -b1, b1)
    w2 = jax.random.uniform(k2, (HIDDEN, ACTION_SPACE), jnp.float32, -b2, b2)
    return w1, w2


def policy_ref(x, w1, w2, mask):
    """Pure-JAX reference of the PyTorch forward (with the same dropout mask)."""
    h = jnp.maximum((x @ w1) * mask, 0.0)
    return jax.nn.softmax(h @ w2, axis=-1)


if __name__ == "__main__":
    key = jax.random.PRNGKey(0)
    kx, kp, kd = jax.random.split(key, 3)

    B = 8  # small batch of CartPole states
    x = jax.random.normal(kx, (B, STATE_SPACE), jnp.float32)
    w1, w2 = init_params(kp)
    # TODO(synk): torch's exact Dropout RNG stream cannot be reproduced; we use
    # jax.random with identical Bernoulli(0.4)/0.4 training-mode semantics.
    mask = make_dropout_mask(kd, B)

    probs = policy_forward(x, w1, w2, mask)
    probs = jax.block_until_ready(probs)

    # sanity: shape, rows sum to 1, and matches the pure-JAX reference
    assert probs.shape == (B, ACTION_SPACE)
    assert bool(jnp.allclose(jnp.sum(probs, axis=-1), 1.0, atol=1e-5))
    ref = policy_ref(x, w1, w2, mask)
    assert bool(jnp.allclose(probs, ref, atol=1e-5, rtol=1e-5))

    print("KERNEL_OK")
</pallas_src>

<mosaic_0001>
module attributes {stable_mosaic.version = 11 : i64} {
  func.func @policy_kernel(%arg0: i32, %arg1: memref<8x4xf32, #tpu.memory_space<vmem>>, %arg2: memref<4x128xf32, #tpu.memory_space<vmem>>, %arg3: memref<1x128xf32, #tpu.memory_space<vmem>>, %arg4: memref<8x128xf32, #tpu.memory_space<vmem>>, %arg5: memref<8x2xf32, #tpu.memory_space<vmem>>) attributes {dimension_semantics = [#tpu.dimension_semantics<parallel>], iteration_bounds = array<i64: 1>, scalar_prefetch = 0 : i64, scratch_operands = 0 : i64, tpu.core_type = #tpu.core_type<tc>, window_params = [{transform_indices = @transform_0, window_bounds = array<i64: 8, 4>}, {pipeline_mode = #tpu.pipeline_mode<synchronous>, transform_indices = @transform_1, window_bounds = array<i64: 4, 128>}, {pipeline_mode = #tpu.pipeline_mode<synchronous>, transform_indices = @transform_2, window_bounds = array<i64: 1, 128>}, {transform_indices = @transform_3, window_bounds = array<i64: 8, 128>}, {transform_indices = @transform_4, window_bounds = array<i64: 8, 2>}]} {
    %c0 = arith.constant 0 : index
    %c0_0 = arith.constant 0 : index
    %0 = vector.load %arg1[%c0, %c0_0] : memref<8x4xf32, #tpu.memory_space<vmem>>, vector<8x4xf32>
    %c0_1 = arith.constant 0 : index
    %c0_2 = arith.constant 0 : index
    %1 = vector.load %arg2[%c0_1, %c0_2] : memref<4x128xf32, #tpu.memory_space<vmem>>, vector<4x128xf32>
    %2 = vector.extract_strided_slice %0 {offsets = [0, 0], sizes = [8, 1], strides = [1, 1]} : vector<8x4xf32> to vector<8x1xf32>
    %3 = vector.extract_strided_slice %1 {offsets = [0, 0], sizes = [1, 128], strides = [1, 1]} : vector<4x128xf32> to vector<1x128xf32>
    %4 = vector.broadcast %2 : vector<8x1xf32> to vector<8x128xf32>
    %5 = vector.broadcast %3 : vector<1x128xf32> to vector<8x128xf32>
    %6 = arith.mulf %4, %5 : vector<8x128xf32>
    %7 = vector.extract_strided_slice %0 {offsets = [0, 1], sizes = [8, 1], strides = [1, 1]} : vector<8x4xf32> to vector<8x1xf32>
    %8 = vector.extract_strided_slice %1 {offsets = [1, 0], sizes = [1, 128], strides = [1, 1]} : vector<4x128xf32> to vector<1x128xf32>
    %9 = vector.broadcast %7 : vector<8x1xf32> to vector<8x128xf32>
    %10 = vector.broadcast %8 : vector<1x128xf32> to vector<8x128xf32>
    %11 = arith.mulf %9, %10 : vector<8x128xf32>
    %12 = arith.addf %6, %11 : vector<8x128xf32>
    %13 = vector.extract_strided_slice %0 {offsets = [0, 2], sizes = [8, 1], strides = [1, 1]} : vector<8x4xf32> to vector<8x1xf32>
    %14 = vector.extract_strided_slice %1 {offsets = [2, 0], sizes = [1, 128], strides = [1, 1]} : vector<4x128xf32> to vector<1x128xf32>
    %15 = vector.broadcast %13 : vector<8x1xf32> to vector<8x128xf32>
    %16 = vector.broadcast %14 : vector<1x128xf32> to vector<8x128xf32>
    %17 = arith.mulf %15, %16 : vector<8x128xf32>
    %18 = arith.addf %12, %17 : vector<8x128xf32>
    %19 = vector.extract_strided_slice %0 {offsets = [0, 3], sizes = [8, 1], strides = [1, 1]} : vector<8x4xf32> to vector<8x1xf32>
    %20 = vector.extract_strided_slice %1 {offsets = [3, 0], sizes = [1, 128], strides = [1, 1]} : vector<4x128xf32> to vector<1x128xf32>
    %21 = vector.broadcast %19 : vector<8x1xf32> to vector<8x128xf32>
    %22 = vector.broadcast %20 : vector<1x128xf32> to vector<8x128xf32>
    %23 = arith.mulf %21, %22 : vector<8x128xf32>
    %24 = arith.addf %18, %23 : vector<8x128xf32>
    %c0_3 = arith.constant 0 : index
    %c0_4 = arith.constant 0 : index
    %25 = vector.load %arg4[%c0_3, %c0_4] : memref<8x128xf32, #tpu.memory_space<vmem>>, vector<8x128xf32>
    %26 = arith.mulf %24, %25 : vector<8x128xf32>
    %cst = arith.constant 0.000000e+00 : f32
    %27 = vector.broadcast %cst : f32 to vector<8x128xf32>
    %28 = arith.maximumf %26, %27 : vector<8x128xf32>
    %c0_5 = arith.constant 0 : index
    %c0_6 = arith.constant 0 : index
    %29 = vector.load %arg3[%c0_5, %c0_6] : memref<1x128xf32, #tpu.memory_space<vmem>>, vector<1x128xf32>
    %30 = vector.broadcast %29 : vector<1x128xf32> to vector<8x128xf32>
    %31 = arith.mulf %28, %30 : vector<8x128xf32>
    %cst_7 = arith.constant dense<0.000000e+00> : vector<8xf32>
    %32 = vector.multi_reduction <add>, %31, %cst_7 [1] : vector<8x128xf32> to vector<8xf32>
    %33 = vector.shape_cast %32 : vector<8xf32> to vector<8x1xf32>
    %cst_8 = arith.constant 0.000000e+00 : f32
    %34 = vector.broadcast %cst_8 : f32 to vector<8x1xf32>
    %35 = arith.subf %34, %33 : vector<8x1xf32>
    %36 = math.exp %35 : vector<8x1xf32>
    %cst_9 = arith.constant 1.000000e+00 : f32
    %37 = vector.broadcast %cst_9 : f32 to vector<8x1xf32>
    %38 = arith.addf %37, %36 : vector<8x1xf32>
    %cst_10 = arith.constant 1.000000e+00 : f32
    %39 = vector.broadcast %cst_10 : f32 to vector<8x1xf32>
    %40 = arith.divf %39, %38 : vector<8x1xf32>
    %cst_11 = arith.constant 1.000000e+00 : f32
    %41 = vector.broadcast %cst_11 : f32 to vector<8x1xf32>
    %42 = arith.subf %41, %40 : vector<8x1xf32>
    %43 = tpu.concatenate %40, %42 in 1 : vector<8x1xf32>, vector<8x1xf32> -> vector<8x2xf32>
    %c0_12 = arith.constant 0 : index
    %c0_13 = arith.constant 0 : index
    %44 = vector.load %arg5[%c0_12, %c0_13] : memref<8x2xf32, #tpu.memory_space<vmem>>, vector<8x2xf32>
    tpu.vector_store %arg5[%c0_12, %c0_13], %43 {strides = array<i32>} : memref<8x2xf32, #tpu.memory_space<vmem>>, vector<8x2xf32>,
    return
  }
  func.func @transform_0(%arg0: i32) -> (i32, i32) {
    %c0_i32 = arith.constant 0 : i32
    %c0_i32_0 = arith.constant 0 : i32
    return %arg0, %c0_i32 : i32, i32
  }
  func.func @transform_1(%arg0: i32) -> (i32, i32) {
    %c0_i32 = arith.constant 0 : i32
    %c0_i32_0 = arith.constant 0 : i32
    %c0_i32_1 = arith.constant 0 : i32
    return %c0_i32, %c0_i32_0 : i32, i32
  }
  func.func @transform_2(%arg0: i32) -> (i32, i32) {
    %c0_i32 = arith.constant 0 : i32
    %c0_i32_0 = arith.constant 0 : i32
    %c0_i32_1 = arith.constant 0 : i32
    return %c0_i32, %c0_i32_0 : i32, i32
  }
  func.func @transform_3(%arg0: i32) -> (i32, i32) {
    %c0_i32 = arith.constant 0 : i32
    %c0_i32_0 = arith.constant 0 : i32
    return %arg0, %c0_i32 : i32, i32
  }
  func.func @transform_4(%arg0: i32) -> (i32, i32) {
    %c0_i32 = arith.constant 0 : i32
    %c0_i32_0 = arith.constant 0 : i32
    return %arg0, %c0_i32 : i32, i32
  }
}

</mosaic_0001>

<llo_original>
// kernel: tpu_custom_call.1
$region0: #{tpu_custom_call.1}
  #allocation0 [shape = 'u32[]', space=smem, size = 0x4, offset = 0x4, fixed_abs, tag = 'smem constant byte address 0x4 - core index']
  #allocation1 [shape = 'u32[144,128]{1,0:T(1,128)}', space=vmem, size = 0x12000, scoped, tag = 'internal scratch']
  %s0 = inlined_call_operand.vmem [shape: f32[8,4], index: 0, kind: input, shape index: {}]
  %s1 = inlined_call_operand.vmem [shape: f32[4,128], index: 1, kind: input, shape index: {}]
  %s2 = inlined_call_operand.vmem [shape: f32[1,128], index: 2, kind: input, shape index: {}]
  %s3 = inlined_call_operand.vmem [shape: f32[8,128], index: 3, kind: input, shape index: {}]
  %s4 = inlined_call_operand.vmem [shape: f32[8,2], index: 4, kind: output, shape index: {}]
  %s5 = sld [smem:[#allocation0]]
  $region26: #{tpu_custom_call.1} parent=0
    _
  %s7 = ssub.s32 1, %s5
  %s8 = scalar_select 0, %s7, %s5
  // Predicated region
  $region2: #{tpu_custom_call.1} parent=0 // pred_check
    _
  $region3: #{tpu_custom_call.1} parent=0 // pred_check_branch
    %10 = sbr.rel (0) target = $region5
  $region4: #{tpu_custom_call.1} parent=0 // pred_region
    _
  $region5: #{tpu_custom_call.1} parent=0 // pred_fallthru
    _
  // Predicated region
  $region6: #{tpu_custom_call.1} parent=0 // pred_check
    _
  $region7: #{tpu_custom_call.1} parent=0 // pred_check_branch
    %12 = sbr.rel (0) target = $region9
  $region8: #{tpu_custom_call.1} parent=0 // pred_region
    _
  $region9: #{tpu_custom_call.1} parent=0 // pred_fallthru
    _
  // Predicated region
  $region10: #{tpu_custom_call.1} parent=0 // pred_check
    _
  $region11: #{tpu_custom_call.1} parent=0 // pred_check_branch
    %14 = sbr.rel (0) target = $region13
  $region12: #{tpu_custom_call.1} parent=0 // pred_region
    _
  $region13: #{tpu_custom_call.1} parent=0 // pred_fallthru
    _
  // Predicated region
  $region14: #{tpu_custom_call.1} parent=0 // pred_check
    _
  $region15: #{tpu_custom_call.1} parent=0 // pred_check_branch
    %16 = sbr.rel (0) target = $region17
  $region16: #{tpu_custom_call.1} parent=0 // pred_region
    _
  $region17: #{tpu_custom_call.1} parent=0 // pred_fallthru
    _
  %v17 = vld [vmem:[%s0] sm:$0xff]
  %v18 = vld [vmem:[%s1] sm:$0xf]
  %20 = vset.pattern.permute.xlu0 0
  %21 = vperm.xlu0 %20, %v17
  %v22 = vpop.permute.xlu0 %21
  %v24 = vlaneseq
  %v25 = vshrl.u32 %v24, 7
  %v26 = vsub.s32 0, %v25
  %v27 = vrot.slane %v18, %v26
  %v28 = vmul.f32 %v22, %v27
  %29 = vset.pattern.permute.xlu0 1
  %30 = vperm.xlu0 %29, %v17
  %v31 = vpop.permute.xlu0 %30
  %v33 = vlaneseq
  %v34 = vshrl.u32 %v33, 7
  %v35 = vsub.s32 1, %v34
  %v36 = vrot.slane %v18, %v35
  %v37 = vmul.f32 %v31, %v36
  %v38 = vadd.f32 %v28, %v37
  %39 = vset.pattern.permute.xlu0 2
  %40 = vperm.xlu0 %39, %v17
  %v41 = vpop.permute.xlu0 %40
  %v43 = vlaneseq
  %v44 = vshrl.u32 %v43, 7
  %v45 = vsub.s32 2, %v44
  %v46 = vrot.slane %v18, %v45
  %v47 = vmul.f32 %v41, %v46
  %v48 = vadd.f32 %v38, %v47
  %49 = vset.pattern.permute.xlu0 3
  %50 = vperm.xlu0 %49, %v17
  %v51 = vpop.permute.xlu0 %50
  %v53 = vlaneseq
  %v54 = vshrl.u32 %v53, 7
  %v55 = vsub.s32 3, %v54
  %v56 = vrot.slane %v18, %v55
  %v57 = vmul.f32 %v51, %v56
  %v58 = vadd.f32 %v48, %v57
  %v59 = vld [vmem:[%s3] sm:$0xff]
  %v60 = vmul.f32 %v58, %v59
  %v61 = vmax.f32 %v60, 0.0
  %v62 = vld [vmem:[%s2] sm:$0x1]
  %v64 = vlaneseq
  %v65 = vshrl.u32 %v64, 7
  %v66 = vsub.s32 0, %v65
  %v67 = vrot.slane %v62, %v66
  %v69 = vmul.f32 %v61, %v67
  %70 = vadd.xlane.f32.xlu0 %v69
  %v71 = vpop.xlane.xlu0 %70
  %v72 = vsub.f32 0.0, %v71
  %v73 = vmul.f32 %v72, 1.442695
  %v74 = vpow.pop %v73
  %v75 = vadd.f32 %v74, 1.0
  %v76 = vrcp.pop %v75
  %v77 = vmul.f32 1.0, %v76
  %v78 = vsub.f32 1.0, %v77
  %vm79 = vcmask 7168
  %v80 = vsel %vm79, %v77, %v78
  %vm81 = vcmask 15360
  %82 = vst.msk [vmem:[%s4] sm:$0xff] %vm81, %v80
  // Predicated region
  $region18: #{tpu_custom_call.1} parent=0 // pred_check
    _
  $region19: #{tpu_custom_call.1} parent=0 // pred_check_branch
    %84 = sbr.rel (0) target = $region21
  $region20: #{tpu_custom_call.1} parent=0 // pred_region
    _
  $region21: #{tpu_custom_call.1} parent=0 // pred_fallthru
    _
  // Predicated region
  $region22: #{tpu_custom_call.1} parent=0 // pred_check
    _
  $region23: #{tpu_custom_call.1} parent=0 // pred_check_branch
    %86 = sbr.rel (0) target = $region25
  $region24: #{tpu_custom_call.1} parent=0 // pred_region
    _
  $region25: #{tpu_custom_call.1} parent=0 // pred_fallthru
    _

</llo_original>
